<compile_context>
chip_gen: v7x
topology: tpu7x:2x2x1
jax: 0.10.0
libtpu: 0.0.40
codegen_flags: <defaults>
</compile_context>

<pallas_src>
import jax
import jax.numpy as jnp
from jax.experimental import pallas as pl
from jax.experimental.pallas import tpu as pltpu


def dm_kernel(xs_ref, xo_ref, r_ref, out_ref):
    # xs_ref / xo_ref: (TB, D) gathered subject/object rows (dense tiles)
    # r_ref:           (1, D) relation vector (broadcast over sublanes)
    # out_ref:         (1, TB) lane-dense score row
    xs = xs_ref[...].astype(jnp.float32)
    xo = xo_ref[...].astype(jnp.float32)
    r = r_ref[...].astype(jnp.float32)
    score = jnp.sum(xs * r * xo, axis=-1)                 # (TB,)
    out_ref[...] = jax.nn.sigmoid(score).reshape(1, -1).astype(out_ref.dtype)


def _round_up(x, m):
    return ((x + m - 1) // m) * m


def distmult_forward(emb, r, batch_ind, *, tb_max=512):
    """emb: (N, D), r: (D,), batch_ind: (B, 2) int32 -> (B,) float32 scores."""
    B = batch_ind.shape[0]
    D = emb.shape[1]

    # Tile size: multiple of 128 (lane-dense output, full sublanes), capped so
    # 2 inputs x 2 pipeline buffers x TB x D x 4B <= ~8 MiB (safe on all gens).
    vmem_budget = 8 * 1024 * 1024
    tb_cap = max(128, ((vmem_budget // (16 * D)) // 128) * 128)
    tb = max(128, min(tb_max, tb_cap, _round_up(B, 128)))

    num_tiles = -(-B // tb)
    Bp = num_tiles * tb

    # Hoist the embedding gather out of the kernel: dense contiguous inputs.
    xs = jnp.take(emb, batch_ind[:, 0], axis=0)           # (B, D)
    xo = jnp.take(emb, batch_ind[:, 1], axis=0)           # (B, D)
    if Bp != B:
        pad = ((0, Bp - B), (0, 0))
        xs = jnp.pad(xs, pad)
        xo = jnp.pad(xo, pad)
    r2 = r.reshape(1, D)

    out2d = pl.pallas_call(
        dm_kernel,
        out_shape=jax.ShapeDtypeStruct((num_tiles, tb), jnp.float32),
        grid=(num_tiles,),
        in_specs=[
            pl.BlockSpec((tb, D), lambda i: (i, 0)),       # subject rows tile
            pl.BlockSpec((tb, D), lambda i: (i, 0)),       # object rows tile
            pl.BlockSpec((1, D), lambda i: (0, 0)),        # relation vector
        ],
        out_specs=pl.BlockSpec((1, tb), lambda i: (i, 0)),  # lane-dense scores
        compiler_params=pltpu.CompilerParams(
            dimension_semantics=("parallel",),
        ),
    )(xs, xo, r2)

    return out2d.reshape(-1)[:B]


if __name__ == "__main__":
    key = jax.random.PRNGKey(0)
    k_emb, k_r, k_ind = jax.random.split(key, 3)

    num_emb = 16      # rows in the embedding table
    dm_dim = 128      # embedding / relation dimension
    batch = 8

    emb = jax.random.normal(k_emb, (num_emb, dm_dim), dtype=jnp.float32)
    r = jax.random.normal(k_r, (dm_dim,), dtype=jnp.float32)
    batch_ind = jax.random.randint(k_ind, (batch, 2), 0, num_emb, dtype=jnp.int32)

    out = distmult_forward(emb, r, batch_ind)
    out = jax.block_until_ready(out)

    # Pure-JAX reference for correctness.
    x = emb[batch_ind]                       # (B, 2, D)
    ref = jax.nn.sigmoid(jnp.sum(x[:, 0, :] * r * x[:, 1, :], axis=1))
    assert out.shape == (batch,)
    assert jnp.allclose(out, ref, atol=1e-5, rtol=1e-5)

    print("KERNEL_OK")
</pallas_src>

<mosaic_0001>
module attributes {stable_mosaic.version = 11 : i64} {
  func.func @dm_kernel(%arg0: i32, %arg1: memref<128x128xf32, #tpu.memory_space<vmem>>, %arg2: memref<128x128xf32, #tpu.memory_space<vmem>>, %arg3: memref<1x128xf32, #tpu.memory_space<vmem>>, %arg4: memref<1x128xf32, #tpu.memory_space<vmem>>) attributes {dimension_semantics = [#tpu.dimension_semantics<parallel>], iteration_bounds = array<i64: 1>, scalar_prefetch = 0 : i64, scratch_operands = 0 : i64, tpu.core_type = #tpu.core_type<tc>, window_params = [{transform_indices = @transform_0, window_bounds = array<i64: 128, 128>}, {transform_indices = @transform_1, window_bounds = array<i64: 128, 128>}, {pipeline_mode = #tpu.pipeline_mode<synchronous>, transform_indices = @transform_2, window_bounds = array<i64: 1, 128>}, {transform_indices = @transform_3, window_bounds = array<i64: 1, 128>}]} {
    %c0 = arith.constant 0 : index
    %c0_0 = arith.constant 0 : index
    %0 = vector.load %arg1[%c0, %c0_0] : memref<128x128xf32, #tpu.memory_space<vmem>>, vector<128x128xf32>
    %c0_1 = arith.constant 0 : index
    %c0_2 = arith.constant 0 : index
    %1 = vector.load %arg2[%c0_1, %c0_2] : memref<128x128xf32, #tpu.memory_space<vmem>>, vector<128x128xf32>
    %c0_3 = arith.constant 0 : index
    %c0_4 = arith.constant 0 : index
    %2 = vector.load %arg3[%c0_3, %c0_4] : memref<1x128xf32, #tpu.memory_space<vmem>>, vector<1x128xf32>
    %3 = vector.broadcast %2 : vector<1x128xf32> to vector<128x128xf32>
    %4 = arith.mulf %0, %3 : vector<128x128xf32>
    %5 = arith.mulf %4, %1 : vector<128x128xf32>
    %cst = arith.constant dense<0.000000e+00> : vector<128xf32>
    %6 = vector.multi_reduction <add>, %5, %cst [1] : vector<128x128xf32> to vector<128xf32>
    %7 = arith.negf %6 : vector<128xf32>
    %8 = math.exp %7 : vector<128xf32>
    %cst_5 = arith.constant 1.000000e+00 : f32
    %9 = vector.broadcast %cst_5 : f32 to vector<128xf32>
    %10 = arith.addf %9, %8 : vector<128xf32>
    %11 = arith.divf %9, %10 : vector<128xf32>
    %12 = vector.shape_cast %11 : vector<128xf32> to vector<1x128xf32>
    %c0_6 = arith.constant 0 : index
    %c0_7 = arith.constant 0 : index
    %13 = vector.load %arg4[%c0_6, %c0_7] : memref<1x128xf32, #tpu.memory_space<vmem>>, vector<1x128xf32>
    tpu.vector_store %arg4[%c0_6, %c0_7], %12 {strides = array<i32>} : memref<1x128xf32, #tpu.memory_space<vmem>>, vector<1x128xf32>,
    return
  }
  func.func @transform_0(%arg0: i32) -> (i32, i32) {
    %c0_i32 = arith.constant 0 : i32
    %c0_i32_0 = arith.constant 0 : i32
    return %arg0, %c0_i32 : i32, i32
  }
  func.func @transform_1(%arg0: i32) -> (i32, i32) {
    %c0_i32 = arith.constant 0 : i32
    %c0_i32_0 = arith.constant 0 : i32
    return %arg0, %c0_i32 : i32, i32
  }
  func.func @transform_2(%arg0: i32) -> (i32, i32) {
    %c0_i32 = arith.constant 0 : i32
    %c0_i32_0 = arith.constant 0 : i32
    %c0_i32_1 = arith.constant 0 : i32
    return %c0_i32, %c0_i32_0 : i32, i32
  }
  func.func @transform_3(%arg0: i32) -> (i32, i32) {
    %c0_i32 = arith.constant 0 : i32
    %c0_i32_0 = arith.constant 0 : i32
    return %arg0, %c0_i32 : i32, i32
  }
}

</mosaic_0001>

<llo_original>
// kernel: tpu_custom_call.1
$region0: #{tpu_custom_call.1}
  #allocation0 [shape = 'u32[]', space=smem, size = 0x4, offset = 0x4, fixed_abs, tag = 'smem constant byte address 0x4 - core index']
  #allocation1 [shape = 'u32[144,128]{1,0:T(1,128)}', space=vmem, size = 0x12000, scoped, tag = 'internal scratch']
  %s0 = inlined_call_operand.hbm [shape: f32[128,128], index: 0, kind: input, shape index: {}]
  %s1 = inlined_call_operand.hbm [shape: f32[128,128], index: 1, kind: input, shape index: {}]
  %s2 = inlined_call_operand.vmem [shape: f32[1,128], index: 2, kind: input, shape index: {}]
  %s3 = inlined_call_operand.hbm [shape: f32[1,128], index: 3, kind: output, shape index: {}]
  %s4 = sld [smem:[#allocation0]]
  $region30: #{tpu_custom_call.1} parent=0
    _
  %s6 = ssub.s32 1, %s4
  %s7 = scalar_select 0, %s6, %s4
  $region1: #{tpu_custom_call.1} parent=0
    #allocation2 [shape = 'u8[65536]{0}', space=vmem, size = 0x10000, scoped, tag = 'input window, operand 0, single buffered']
    #allocation3 [shape = 's32[1]{0}', space=sflag, size = 0x4, scoped, tag = 'scoped memory for tpu_custom_call.1']
    #allocation4 [shape = 's32[1]{0}', space=sflag, size = 0x4, scoped, tag = 'scoped memory for tpu_custom_call.1']
    #allocation5 [shape = 'u8[65536]{0}', space=vmem, size = 0x10000, scoped, tag = 'input window, operand 1, single buffered']
    #allocation6 [shape = 's32[1]{0}', space=sflag, size = 0x4, scoped, tag = 'scoped memory for tpu_custom_call.1']
    #allocation7 [shape = 'u8[512]{0}', space=vmem, size = 0x400, scoped, tag = 'output window, operand 0, single buffered']
    %8 = vsyncpa [#allocation3], 0
    %9 = vsyncpa [#allocation6], 0
    %10 = vsyncpa [#allocation4], 0
    // Predicated region
    $region2: #{tpu_custom_call.1} parent=1 // pred_check
      _
    $region3: #{tpu_custom_call.1} parent=1 // pred_check_branch
      %12 = sbr.rel (0) target = $region5
    $region4: #{tpu_custom_call.1} parent=1 // pred_region
      %s14 = ssub.s32 2048, 2048
      %15 = vsyncadd [#allocation3], %s14
      %s16 = sshll.u32 [#allocation2], 4
      %s17 = int_to_ptr.vmem [resolvable:$true] %s16
      %22 = dma.hbm_to_vmem [thread:$0]  %s0, 2048, %s17, [#allocation3], 128, 128, 8
    $region5: #{tpu_custom_call.1} parent=1 // pred_fallthru
      _
    // Predicated region
    $region6: #{tpu_custom_call.1} parent=1 // pred_check
      _
    $region7: #{tpu_custom_call.1} parent=1 // pred_check_branch
      %24 = sbr.rel (0) target = $region9
    $region8: #{tpu_custom_call.1} parent=1 // pred_region
      %s26 = ssub.s32 2048, 2048
      %27 = vsyncadd [#allocation6], %s26
      %s28 = sshll.u32 [#allocation5], 4
      %s29 = int_to_ptr.vmem [resolvable:$true] %s28
      %34 = dma.hbm_to_vmem [thread:$0]  %s1, 2048, %s29, [#allocation6], 128, 128, 8
    $region9: #{tpu_custom_call.1} parent=1 // pred_fallthru
      _
    // Predicated region
    $region10: #{tpu_custom_call.1} parent=1 // pred_check
      _
    $region11: #{tpu_custom_call.1} parent=1 // pred_check_branch
      %36 = sbr.rel (0) target = $region13
    $region12: #{tpu_custom_call.1} parent=1 // pred_region
      _
    $region13: #{tpu_custom_call.1} parent=1 // pred_fallthru
      _
    // Predicated region
    $region14: #{tpu_custom_call.1} parent=1 // pred_check
      _
    $region15: #{tpu_custom_call.1} parent=1 // pred_check_branch
      %38 = sbr.rel (0) target = $region17
    $region16: #{tpu_custom_call.1} parent=1 // pred_region
      %39 = dma.done [#allocation3], 2048
    $region17: #{tpu_custom_call.1} parent=1 // pred_fallthru
      _
    // Predicated region
    $region18: #{tpu_custom_call.1} parent=1 // pred_check
      _
    $region19: #{tpu_custom_call.1} parent=1 // pred_check_branch
      %41 = sbr.rel (0) target = $region21
    $region20: #{tpu_custom_call.1} parent=1 // pred_region
      %42 = dma.done [#allocation6], 2048
    $region21: #{tpu_custom_call.1} parent=1 // pred_fallthru
      _
    %v43 = vld [vmem:[#allocation2] sm:$0xff]
    %v44 = vld [vmem:[#allocation2 + $0x8] sm:$0xff]
    %v45 = vld [vmem:[#allocation2 + $0x10] sm:$0xff]
    %v46 = vld [vmem:[#allocation2 + $0x18] sm:$0xff]
    %v47 = vld [vmem:[#allocation2 + $0x20] sm:$0xff]
    %v48 = vld [vmem:[#allocation2 + $0x28] sm:$0xff]
    %v49 = vld [vmem:[#allocation2 + $0x30] sm:$0xff]
    %v50 = vld [vmem:[#allocation2 + $0x38] sm:$0xff]
    %v51 = vld [vmem:[#allocation2 + $0x40] sm:$0xff]
    %v52 = vld [vmem:[#allocation2 + $0x48] sm:$0xff]
    %v53 = vld [vmem:[#allocation2 + $0x50] sm:$0xff]
    %v54 = vld [vmem:[#allocation2 + $0x58] sm:$0xff]
    %v55 = vld [vmem:[#allocation2 + $0x60] sm:$0xff]
    %v56 = vld [vmem:[#allocation2 + $0x68] sm:$0xff]
    %v57 = vld [vmem:[#allocation2 + $0x70] sm:$0xff]
    %v58 = vld [vmem:[#allocation2 + $0x78] sm:$0xff]
    %v59 = vld [vmem:[#allocation5] sm:$0xff]
    %v60 = vld [vmem:[#allocation5 + $0x8] sm:$0xff]
    %v61 = vld [vmem:[#allocation5 + $0x10] sm:$0xff]
    %v62 = vld [vmem:[#allocation5 + $0x18] sm:$0xff]
    %v63 = vld [vmem:[#allocation5 + $0x20] sm:$0xff]
    %v64 = vld [vmem:[#allocation5 + $0x28] sm:$0xff]
    %v65 = vld [vmem:[#allocation5 + $0x30] sm:$0xff]
    %v66 = vld [vmem:[#allocation5 + $0x38] sm:$0xff]
    %v67 = vld [vmem:[#allocation5 + $0x40] sm:$0xff]
    %v68 = vld [vmem:[#allocation5 + $0x48] sm:$0xff]
    %v69 = vld [vmem:[#allocation5 + $0x50] sm:$0xff]
    %v70 = vld [vmem:[#allocation5 + $0x58] sm:$0xff]
    %v71 = vld [vmem:[#allocation5 + $0x60] sm:$0xff]
    %v72 = vld [vmem:[#allocation5 + $0x68] sm:$0xff]
    %v73 = vld [vmem:[#allocation5 + $0x70] sm:$0xff]
    %v74 = vld [vmem:[#allocation5 + $0x78] sm:$0xff]
    %v75 = vld [vmem:[%s2] sm:$0x1]
    %v77 = vlaneseq
    %v78 = vshrl.u32 %v77, 7
    %v79 = vsub.s32 0, %v78
    %v80 = vrot.slane %v75, %v79
    %v82 = vmul.f32 %v43, %v80
    %v83 = vmul.f32 %v44, %v80
    %v84 = vmul.f32 %v45, %v80
    %v85 = vmul.f32 %v46, %v80
    %v86 = vmul.f32 %v47, %v80
    %v87 = vmul.f32 %v48, %v80
    %v88 = vmul.f32 %v49, %v80
    %v89 = vmul.f32 %v50, %v80
    %v90 = vmul.f32 %v51, %v80
    %v91 = vmul.f32 %v52, %v80
    %v92 = vmul.f32 %v53, %v80
    %v93 = vmul.f32 %v54, %v80
    %v94 = vmul.f32 %v55, %v80
    %v95 = vmul.f32 %v56, %v80
    %v96 = vmul.f32 %v57, %v80
    %v97 = vmul.f32 %v58, %v80
    %v98 = vmul.f32 %v82, %v59
    %v99 = vmul.f32 %v83, %v60
    %v100 = vmul.f32 %v84, %v61
    %v101 = vmul.f32 %v85, %v62
    %v102 = vmul.f32 %v86, %v63
    %v103 = vmul.f32 %v87, %v64
    %v104 = vmul.f32 %v88, %v65
    %v105 = vmul.f32 %v89, %v66
    %v106 = vmul.f32 %v90, %v67
    %v107 = vmul.f32 %v91, %v68
    %v108 = vmul.f32 %v92, %v69
    %v109 = vmul.f32 %v93, %v70
    %v110 = vmul.f32 %v94, %v71
    %v111 = vmul.f32 %v95, %v72
    %v112 = vmul.f32 %v96, %v73
    %v113 = vmul.f32 %v97, %v74
    %114 = vadd.xlane.f32.xlu0 %v98
    %v115 = vpop.xlane.xlu0 %114
    %116 = vadd.xlane.f32.xlu0 %v99
    %v117 = vpop.xlane.xlu0 %116
    %118 = vadd.xlane.f32.xlu0 %v100
    %v119 = vpop.xlane.xlu0 %118
    %120 = vadd.xlane.f32.xlu0 %v101
    %v121 = vpop.xlane.xlu0 %120
    %122 = vadd.xlane.f32.xlu0 %v102
    %v123 = vpop.xlane.xlu0 %122
    %124 = vadd.xlane.f32.xlu0 %v103
    %v125 = vpop.xlane.xlu0 %124
    %126 = vadd.xlane.f32.xlu0 %v104
    %v127 = vpop.xlane.xlu0 %126
    %128 = vadd.xlane.f32.xlu0 %v105
    %v129 = vpop.xlane.xlu0 %128
    %130 = vadd.xlane.f32.xlu0 %v106
    %v131 = vpop.xlane.xlu0 %130
    %132 = vadd.xlane.f32.xlu0 %v107
    %v133 = vpop.xlane.xlu0 %132
    %134 = vadd.xlane.f32.xlu0 %v108
    %v135 = vpop.xlane.xlu0 %134
    %136 = vadd.xlane.f32.xlu0 %v109
    %v137 = vpop.xlane.xlu0 %136
    %138 = vadd.xlane.f32.xlu0 %v110
    %v139 = vpop.xlane.xlu0 %138
    %140 = vadd.xlane.f32.xlu0 %v111
    %v141 = vpop.xlane.xlu0 %140
    %142 = vadd.xlane.f32.xlu0 %v112
    %v143 = vpop.xlane.xlu0 %142
    %144 = vadd.xlane.f32.xlu0 %v113
    %v145 = vpop.xlane.xlu0 %144
    %v146 = vxor.u32 %v115, 2147483648
    %v147 = vxor.u32 %v117, 2147483648
    %v148 = vxor.u32 %v119, 2147483648
    %v149 = vxor.u32 %v121, 2147483648
    %v150 = vxor.u32 %v123, 2147483648
    %v151 = vxor.u32 %v125, 2147483648
    %v152 = vxor.u32 %v127, 2147483648
    %v153 = vxor.u32 %v129, 2147483648
    %v154 = vxor.u32 %v131, 2147483648
    %v155 = vxor.u32 %v133, 2147483648
    %v156 = vxor.u32 %v135, 2147483648
    %v157 = vxor.u32 %v137, 2147483648
    %v158 = vxor.u32 %v139, 2147483648
    %v159 = vxor.u32 %v141, 2147483648
    %v160 = vxor.u32 %v143, 2147483648
    %v161 = vxor.u32 %v145, 2147483648
    %v162 = vmul.f32 %v146, 1.442695
    %v163 = vpow.pop %v162
    %v164 = vmul.f32 %v147, 1.442695
    %v165 = vpow.pop %v164
    %v166 = vmul.f32 %v148, 1.442695
    %v167 = vpow.pop %v166
    %v168 = vmul.f32 %v149, 1.442695
    %v169 = vpow.pop %v168
    %v170 = vmul.f32 %v150, 1.442695
    %v171 = vpow.pop %v170
    %v172 = vmul.f32 %v151, 1.442695
    %v173 = vpow.pop %v172
    %v174 = vmul.f32 %v152, 1.442695
    %v175 = vpow.pop %v174
    %v176 = vmul.f32 %v153, 1.442695
    %v177 = vpow.pop %v176
    %v178 = vmul.f32 %v154, 1.442695
    %v179 = vpow.pop %v178
    %v180 = vmul.f32 %v155, 1.442695
    %v181 = vpow.pop %v180
    %v182 = vmul.f32 %v156, 1.442695
    %v183 = vpow.pop %v182
    %v184 = vmul.f32 %v157, 1.442695
    %v185 = vpow.pop %v184
    %v186 = vmul.f32 %v158, 1.442695
    %v187 = vpow.pop %v186
    %v188 = vmul.f32 %v159, 1.442695
    %v189 = vpow.pop %v188
    %v190 = vmul.f32 %v160, 1.442695
    %v191 = vpow.pop %v190
    %v192 = vmul.f32 %v161, 1.442695
    %v193 = vpow.pop %v192
    %v194 = vadd.f32 %v163, 1.0
    %v195 = vadd.f32 %v165, 1.0
    %v196 = vadd.f32 %v167, 1.0
    %v197 = vadd.f32 %v169, 1.0
    %v198 = vadd.f32 %v171, 1.0
    %v199 = vadd.f32 %v173, 1.0
    %v200 = vadd.f32 %v175, 1.0
    %v201 = vadd.f32 %v177, 1.0
    %v202 = vadd.f32 %v179, 1.0
    %v203 = vadd.f32 %v181, 1.0
    %v204 = vadd.f32 %v183, 1.0
    %v205 = vadd.f32 %v185, 1.0
    %v206 = vadd.f32 %v187, 1.0
    %v207 = vadd.f32 %v189, 1.0
    %v208 = vadd.f32 %v191, 1.0
    %v209 = vadd.f32 %v193, 1.0
    %v210 = vrcp.pop %v194
    %v211 = vmul.f32 1.0, %v210
    %v212 = vrcp.pop %v195
    %v213 = vmul.f32 1.0, %v212
    %v214 = vrcp.pop %v196
    %v215 = vmul.f32 1.0, %v214
    %v216 = vrcp.pop %v197
    %v217 = vmul.f32 1.0, %v216
    %v218 = vrcp.pop %v198
    %v219 = vmul.f32 1.0, %v218
    %v220 = vrcp.pop %v199
    %v221 = vmul.f32 1.0, %v220
    %v222 = vrcp.pop %v200
    %v223 = vmul.f32 1.0, %v222
    %v224 = vrcp.pop %v201
    %v225 = vmul.f32 1.0, %v224
    %v226 = vrcp.pop %v202
    %v227 = vmul.f32 1.0, %v226
    %v228 = vrcp.pop %v203
    %v229 = vmul.f32 1.0, %v228
    %v230 = vrcp.pop %v204
    %v231 = vmul.f32 1.0, %v230
    %v232 = vrcp.pop %v205
    %v233 = vmul.f32 1.0, %v232
    %v234 = vrcp.pop %v206
    %v235 = vmul.f32 1.0, %v234
    %v236 = vrcp.pop %v207
    %v237 = vmul.f32 1.0, %v236
    %v238 = vrcp.pop %v208
    %v239 = vmul.f32 1.0, %v238
    %v240 = vrcp.pop %v209
    %v241 = vmul.f32 1.0, %v240
    %v258 = vlaneseq
    %v259 = vand.u32 %v258, 127
    %v260 = vlaneseq
    %v261 = vshrl.u32 %v260, 7
    %v262 = vsub.s32 %v259, %v261
    %v263 = vrot.slane %v211, %v262
    %v264 = vadd.s32 %v259, 4294967288
    %v265 = vlaneseq
    %v266 = vshrl.u32 %v265, 7
    %v267 = vsub.s32 %v264, %v266
    %v268 = vrot.slane %v213, %v267
    %vm269 = vcmask 130112
    %v270 = vsel %vm269, %v268, %v263
    %v271 = vadd.s32 %v259, 4294967280
    %v272 = vlaneseq
    %v273 = vshrl.u32 %v272, 7
    %v274 = vsub.s32 %v271, %v273
    %v275 = vrot.slane %v215, %v274
    %vm276 = vcmask 195712
    %v277 = vsel %vm276, %v275, %v270
    %v278 = vadd.s32 %v259, 4294967272
    %v279 = vlaneseq
    %v280 = vshrl.u32 %v279, 7
    %v281 = vsub.s32 %v278, %v280
    %v282 = vrot.slane %v217, %v281
    %vm283 = vcmask 261312
    %v284 = vsel %vm283, %v282, %v277
    %v285 = vadd.s32 %v259, 4294967264
    %v286 = vlaneseq
    %v287 = vshrl.u32 %v286, 7
    %v288 = vsub.s32 %v285, %v287
    %v289 = vrot.slane %v219, %v288
    %vm290 = vcmask 326912
    %v291 = vsel %vm290, %v289, %v284
    %v292 = vadd.s32 %v259, 4294967256
    %v293 = vlaneseq
    %v294 = vshrl.u32 %v293, 7
    %v295 = vsub.s32 %v292, %v294
    %v296 = vrot.slane %v221, %v295
    %vm297 = vcmask 392512
    %v298 = vsel %vm297, %v296, %v291
    %v299 = vadd.s32 %v259, 4294967248
    %v300 = vlaneseq
    %v301 = vshrl.u32 %v300, 7
    %v302 = vsub.s32 %v299, %v301
    %v303 = vrot.slane %v223, %v302
    %vm304 = vcmask 458112
    %v305 = vsel %vm304, %v303, %v298
    %v306 = vadd.s32 %v259, 4294967240
    %v307 = vlaneseq
    %v308 = vshrl.u32 %v307, 7
    %v309 = vsub.s32 %v306, %v308
    %v310 = vrot.slane %v225, %v309
    %vm311 = vcmask 523712
    %v312 = vsel %vm311, %v310, %v305
    %v313 = vadd.s32 %v259, 4294967232
    %v314 = vlaneseq
    %v315 = vshrl.u32 %v314, 7
    %v316 = vsub.s32 %v313, %v315
    %v317 = vrot.slane %v227, %v316
    %vm318 = vcmask 589312
    %v319 = vsel %vm318, %v317, %v312
    %v320 = vadd.s32 %v259, 4294967224
    %v321 = vlaneseq
    %v322 = vshrl.u32 %v321, 7
    %v323 = vsub.s32 %v320, %v322
    %v324 = vrot.slane %v229, %v323
    %vm325 = vcmask 654912
    %v326 = vsel %vm325, %v324, %v319
    %v327 = vadd.s32 %v259, 4294967216
    %v328 = vlaneseq
    %v329 = vshrl.u32 %v328, 7
    %v330 = vsub.s32 %v327, %v329
    %v331 = vrot.slane %v231, %v330
    %vm332 = vcmask 720512
    %v333 = vsel %vm332, %v331, %v326
    %v334 = vadd.s32 %v259, 4294967208
    %v335 = vlaneseq
    %v336 = vshrl.u32 %v335, 7
    %v337 = vsub.s32 %v334, %v336
    %v338 = vrot.slane %v233, %v337
    %vm339 = vcmask 786112
    %v340 = vsel %vm339, %v338, %v333
    %v341 = vadd.s32 %v259, 4294967200
    %v342 = vlaneseq
    %v343 = vshrl.u32 %v342, 7
    %v344 = vsub.s32 %v341, %v343
    %v345 = vrot.slane %v235, %v344
    %vm346 = vcmask 851712
    %v347 = vsel %vm346, %v345, %v340
    %v348 = vadd.s32 %v259, 4294967192
    %v349 = vlaneseq
    %v350 = vshrl.u32 %v349, 7
    %v351 = vsub.s32 %v348, %v350
    %v352 = vrot.slane %v237, %v351
    %vm353 = vcmask 917312
    %v354 = vsel %vm353, %v352, %v347
    %v355 = vadd.s32 %v259, 4294967184
    %v356 = vlaneseq
    %v357 = vshrl.u32 %v356, 7
    %v358 = vsub.s32 %v355, %v357
    %v359 = vrot.slane %v239, %v358
    %vm360 = vcmask 982912
    %v361 = vsel %vm360, %v359, %v354
    %v362 = vadd.s32 %v259, 4294967176
    %v363 = vlaneseq
    %v364 = vshrl.u32 %v363, 7
    %v365 = vsub.s32 %v362, %v364
    %v366 = vrot.slane %v241, %v365
    %vm367 = vcmask 1048512
    %v368 = vsel %vm367, %v366, %v361
    %370 = vst [vmem:[#allocation7] sm:$0x1] %v368
    // Predicated region
    $region22: #{tpu_custom_call.1} parent=1 // pred_check
      _
    $region23: #{tpu_custom_call.1} parent=1 // pred_check_branch
      %372 = sbr.rel (0) target = $region25
    $region24: #{tpu_custom_call.1} parent=1 // pred_region
      %s374 = ssub.s32 16, 16
      %375 = vsyncadd [#allocation4], %s374
      %s377 = sshll.u32 [#allocation7], 4
      %s378 = int_to_ptr.vmem [resolvable:$true] %s377
      %380 = dma.vmem_to_hbm [thread:$0]  %s378, 16, %s3, [#allocation4]
    $region25: #{tpu_custom_call.1} parent=1 // pred_fallthru
      _
    // Predicated region
    $region26: #{tpu_custom_call.1} parent=1 // pred_check
      _
    $region27: #{tpu_custom_call.1} parent=1 // pred_check_branch
      %382 = sbr.rel (0) target = $region29
    $region28: #{tpu_custom_call.1} parent=1 // pred_region
      %383 = dma.done [#allocation4], 16
    $region29: #{tpu_custom_call.1} parent=1 // pred_fallthru
      _
    %384 = vsyncpa [#allocation3], 1
    %385 = vsyncpa [#allocation6], 1
    %386 = vsyncpa [#allocation4], 1

</llo_original>
